<compile_context>
chip_gen: v5e
topology: v5e:2x2
jax: 0.10.0
libtpu: 0.0.40
codegen_flags: <defaults>
</compile_context>

<pallas_src>
import math
import functools

import jax
import jax.numpy as jnp
from jax.experimental import pallas as pl
from jax.experimental.pallas import tpu as pltpu


def _round_up(x: int, m: int) -> int:
    return ((x + m - 1) // m) * m


def _maybe_pad2d(a, rows, cols):
    pr, pc = rows - a.shape[0], cols - a.shape[1]
    if pr == 0 and pc == 0:
        return a
    return jnp.pad(a, ((0, pr), (0, pc)))


def _ffn_kernel(x_ref, w1_ref, b1_ref, w2_ref, b2_ref, o_ref, acc_ref):
    # x_ref: (tm, Ep) bf16, w1_ref: (Ep, th) bf16, b1_ref: (1, th) f32,
    # w2_ref: (th, Ep) bf16, b2_ref: (1, Ep) f32, o_ref: (tm, Ep), acc_ref: (tm, Ep) f32
    k = pl.program_id(1)

    @pl.when(k == 0)
    def _():
        acc_ref[...] = jnp.zeros_like(acc_ref)

    # First linear (MXU, bf16 inputs, f32 accumulation) + bias in f32.
    h = jnp.dot(x_ref[...], w1_ref[...],
                preferred_element_type=jnp.float32) + b1_ref[...]

    # GELU (tanh approximation, exactly as the PyTorch module) in f32.
    # c*(h + 0.044715*h^3) == c*h*(1 + 0.044715*h^2)  (one fewer multiply)
    c = jnp.float32(math.sqrt(2.0 / math.pi))
    inner = c * h * (jnp.float32(1.0) + jnp.float32(0.044715) * (h * h))
    g = jnp.float32(0.5) * h * (jnp.float32(1.0) + jnp.tanh(inner))

    # Second linear: accumulate the partial product over this hidden-dim chunk.
    acc_ref[...] += jnp.dot(g.astype(w2_ref.dtype), w2_ref[...],
                            preferred_element_type=jnp.float32)

    @pl.when(k == pl.num_programs(1) - 1)
    def _():
        o_ref[...] = (acc_ref[...] + b2_ref[...]).astype(o_ref.dtype)


@functools.partial(jax.jit, static_argnames=("tm", "th"))
def feed_forward(x, w1, b1, w2, b2, *, tm=256, th=2048):
    """x: (batch, seq, embed). w1: (E, H), b1: (H,), w2: (H, E), b2: (E,).

    Computes GELU_tanh(x @ w1 + b1) @ w2 + b2, matching nn.Linear (y = x @ W.T + b)
    semantics with weights stored as (in_features, out_features).
    """
    B, S, E = x.shape
    H = w1.shape[1]
    out_dtype = x.dtype
    M = B * S

    # --- padded / tiled geometry -------------------------------------------------
    E_p = _round_up(E, 128)                               # lane-dense features
    tm = _round_up(max(8, min(tm, _round_up(M, 8))), 8)   # row tile (sublane multiple)
    M_p = _round_up(M, tm)
    th = _round_up(max(128, min(th, _round_up(H, 128))), 128)   # hidden-dim chunk
    H_p = _round_up(H, th)

    # --- prepare operands (pad + cast matmul inputs to bf16) ----------------------
    x2 = _maybe_pad2d(x.reshape(M, E), M_p, E_p).astype(jnp.bfloat16)
    w1p = _maybe_pad2d(w1, E_p, H_p).astype(jnp.bfloat16)
    w2p = _maybe_pad2d(w2, H_p, E_p).astype(jnp.bfloat16)
    b1p = _maybe_pad2d(b1.astype(jnp.float32).reshape(1, H), 1, H_p)
    b2p = _maybe_pad2d(b2.astype(jnp.float32).reshape(1, E), 1, E_p)

    grid = (M_p // tm, H_p // th)

    # --- VMEM budget (double-buffered streams + resident accumulator + h/g temps) --
    out_bytes = jnp.dtype(out_dtype).itemsize
    vmem_est = (
        2 * tm * E_p * 2            # x tile (bf16), double buffered
        + 2 * tm * E_p * out_bytes  # out tile, double buffered
        + 2 * E_p * th * 2          # w1 slice (bf16), double buffered
        + 2 * th * E_p * 2          # w2 slice (bf16), double buffered
        + 2 * (th + E_p) * 4        # biases (f32)
        + tm * E_p * 4              # f32 accumulator scratch
        + 2 * tm * th * 4           # h / g f32 intermediates
    )
    vmem_limit = min(max(int(1.25 * vmem_est) + (4 << 20), 16 << 20), 56 << 20)

    cost = pl.CostEstimate(
        flops=2 * 2 * M_p * E_p * H_p,
        transcendentals=M_p * H_p,
        bytes_accessed=(x2.size * 2 + M_p * E_p * out_bytes
                        + w1p.size * 2 + w2p.size * 2 + (H_p + E_p) * 4),
    )

    out2 = pl.pallas_call(
        _ffn_kernel,
        out_shape=jax.ShapeDtypeStruct((M_p, E_p), out_dtype),
        grid_spec=pltpu.PrefetchScalarGridSpec(
            num_scalar_prefetch=0,
            grid=grid,
            in_specs=[
                pl.BlockSpec((tm, E_p), lambda i, k: (i, 0)),   # x rows tile
                pl.BlockSpec((E_p, th), lambda i, k: (0, k)),   # W1 hidden slice
                pl.BlockSpec((1, th), lambda i, k: (0, k)),     # b1 slice
                pl.BlockSpec((th, E_p), lambda i, k: (k, 0)),   # W2 hidden slice
                pl.BlockSpec((1, E_p), lambda i, k: (0, 0)),    # b2 (resident)
            ],
            out_specs=pl.BlockSpec((tm, E_p), lambda i, k: (i, 0)),
            scratch_shapes=[pltpu.VMEM((tm, E_p), jnp.float32)],
        ),
        compiler_params=pltpu.CompilerParams(
            dimension_semantics=("parallel", "arbitrary"),
            vmem_limit_bytes=vmem_limit,
        ),
        cost_estimate=cost,
    )(x2, w1p, b1p, w2p, b2p)

    return out2[:M, :E].reshape(B, S, E)


def _reference(x, w1, b1, w2, b2):
    h = x @ w1 + b1
    c = math.sqrt(2.0 / math.pi)
    g = 0.5 * h * (1.0 + jnp.tanh(c * (h + 0.044715 * h**3)))
    return g @ w2 + b2


def _make_params(key, embed, hidden):
    kw1, kb1, kw2, kb2 = jax.random.split(key, 4)
    bound1 = 1.0 / math.sqrt(embed)
    w1 = jax.random.uniform(kw1, (embed, hidden), jnp.float32, -bound1, bound1)
    b1 = jax.random.uniform(kb1, (hidden,), jnp.float32, -bound1, bound1)
    bound2 = 1.0 / math.sqrt(hidden)
    w2 = jax.random.uniform(kw2, (hidden, embed), jnp.float32, -bound2, bound2)
    b2 = jax.random.uniform(kb2, (embed,), jnp.float32, -bound2, bound2)
    return w1, b1, w2, b2


if __name__ == "__main__":
    key = jax.random.PRNGKey(0)
    kx1, kp1, kx2, kp2 = jax.random.split(key, 4)

    # Small shapes consistent with FeedForward: embed_dim=32 -> hidden_dim=4*32=128.
    batch, seq, embed = 2, 8, 32
    hidden = embed * 4
    x = jax.random.normal(kx1, (batch, seq, embed), dtype=jnp.float32)
    w1, b1, w2, b2 = _make_params(kp1, embed, hidden)

    out = jax.block_until_ready(feed_forward(x, w1, b1, w2, b2))
    ref = _reference(x, w1, b1, w2, b2)
    assert out.shape == (batch, seq, embed)
    # bf16 matmul inputs with f32 accumulation -> loosen tolerance vs the f32 reference.
    assert jnp.allclose(out, ref, atol=2e-2, rtol=2e-2), "mismatch vs reference (single-k)"

    # Second check exercising the hidden-dim reduction axis (multiple k grid steps).
    embed2, hidden2 = 256, 1024
    x2 = jax.random.normal(kx2, (batch, seq, embed2), dtype=jnp.float32)
    w1b, b1b, w2b, b2b = _make_params(kp2, embed2, hidden2)
    out2 = jax.block_until_ready(feed_forward(x2, w1b, b1b, w2b, b2b, th=256))
    ref2 = _reference(x2, w1b, b1b, w2b, b2b)
    assert out2.shape == (batch, seq, embed2)
    assert jnp.allclose(out2, ref2, atol=5e-2, rtol=5e-2), "mismatch vs reference (multi-k)"

    print("KERNEL_OK")
</pallas_src>

<mosaic_0001>
module attributes {stable_mosaic.version = 11 : i64} {
  func.func @_ffn_kernel(%arg0: i32, %arg1: i32, %arg2: memref<16x128xbf16, #tpu.memory_space<vmem>>, %arg3: memref<128x128xbf16, #tpu.memory_space<vmem>>, %arg4: memref<1x128xf32, #tpu.memory_space<vmem>>, %arg5: memref<128x128xbf16, #tpu.memory_space<vmem>>, %arg6: memref<1x128xf32, #tpu.memory_space<vmem>>, %arg7: memref<16x128xf32, #tpu.memory_space<vmem>>, %arg8: memref<16x128xf32, #tpu.memory_space<vmem>>) attributes {dimension_semantics = [#tpu.dimension_semantics<parallel>, #tpu.dimension_semantics<arbitrary>], iteration_bounds = array<i64: 1, 1>, scalar_prefetch = 0 : i64, scratch_operands = 1 : i64, tpu.core_type = #tpu.core_type<tc>, window_params = [{transform_indices = @transform_0, window_bounds = array<i64: 16, 128>}, {transform_indices = @transform_1, window_bounds = array<i64: 128, 128>}, {transform_indices = @transform_2, window_bounds = array<i64: 1, 128>}, {transform_indices = @transform_3, window_bounds = array<i64: 128, 128>}, {pipeline_mode = #tpu.pipeline_mode<synchronous>, transform_indices = @transform_4, window_bounds = array<i64: 1, 128>}, {transform_indices = @transform_5, window_bounds = array<i64: 16, 128>}]} {
    %c0_i32 = arith.constant 0 : i32
    %0 = arith.cmpi eq, %arg1, %c0_i32 : i32
    %1 = arith.extui %0 : i1 to i32
    %c0_i32_0 = arith.constant 0 : i32
    %2 = arith.cmpi ne, %1, %c0_i32_0 : i32
    scf.if %2 {
      %cst_20 = arith.constant 0.000000e+00 : f32
      %32 = vector.broadcast %cst_20 : f32 to vector<16x128xf32>
      %c0_21 = arith.constant 0 : index
      %c0_22 = arith.constant 0 : index
      %33 = vector.load %arg8[%c0_21, %c0_22] : memref<16x128xf32, #tpu.memory_space<vmem>>, vector<16x128xf32>
      tpu.vector_store %arg8[%c0_21, %c0_22], %32 {strides = array<i32>} : memref<16x128xf32, #tpu.memory_space<vmem>>, vector<16x128xf32>,
    } else {
    }
    %c0 = arith.constant 0 : index
    %c0_1 = arith.constant 0 : index
    %3 = vector.load %arg2[%c0, %c0_1] : memref<16x128xbf16, #tpu.memory_space<vmem>>, vector<16x128xbf16>
    %c0_2 = arith.constant 0 : index
    %c0_3 = arith.constant 0 : index
    %4 = vector.load %arg3[%c0_2, %c0_3] : memref<128x128xbf16, #tpu.memory_space<vmem>>, vector<128x128xbf16>
    %cst = arith.constant dense<0.000000e+00> : vector<16x128xf32>
    %5 = tpu.matmul %3, %4, %cst {dimension_numbers = #tpu.dot_dimension_numbers<[1], [0], [0], [1], [0, 0, 1, 1], [], []>} : vector<16x128xbf16>, vector<128x128xbf16>, vector<16x128xf32> -> vector<16x128xf32>
    %c0_4 = arith.constant 0 : index
    %c0_5 = arith.constant 0 : index
    %6 = vector.load %arg4[%c0_4, %c0_5] : memref<1x128xf32, #tpu.memory_space<vmem>>, vector<1x128xf32>
    %7 = vector.broadcast %6 : vector<1x128xf32> to vector<16x128xf32>
    %8 = arith.addf %5, %7 : vector<16x128xf32>
    %cst_6 = arith.constant 0.797884583 : f32
    %9 = vector.broadcast %cst_6 : f32 to vector<16x128xf32>
    %10 = arith.mulf %9, %8 : vector<16x128xf32>
    %11 = arith.mulf %8, %8 : vector<16x128xf32>
    %cst_7 = arith.constant 4.471500e-02 : f32
    %12 = vector.broadcast %cst_7 : f32 to vector<16x128xf32>
    %13 = arith.mulf %12, %11 : vector<16x128xf32>
    %cst_8 = arith.constant 1.000000e+00 : f32
    %14 = vector.broadcast %cst_8 : f32 to vector<16x128xf32>
    %15 = arith.addf %14, %13 : vector<16x128xf32>
    %16 = arith.mulf %10, %15 : vector<16x128xf32>
    %cst_9 = arith.constant 5.000000e-01 : f32
    %17 = vector.broadcast %cst_9 : f32 to vector<16x128xf32>
    %18 = arith.mulf %17, %8 : vector<16x128xf32>
    %19 = math.tanh %16 : vector<16x128xf32>
    %cst_10 = arith.constant 1.000000e+00 : f32
    %20 = vector.broadcast %cst_10 : f32 to vector<16x128xf32>
    %21 = arith.addf %20, %19 : vector<16x128xf32>
    %22 = arith.mulf %18, %21 : vector<16x128xf32>
    %c0_11 = arith.constant 0 : index
    %c0_12 = arith.constant 0 : index
    %23 = vector.load %arg8[%c0_11, %c0_12] : memref<16x128xf32, #tpu.memory_space<vmem>>, vector<16x128xf32>
    %24 = arith.truncf %22 : vector<16x128xf32> to vector<16x128xbf16>
    %c0_13 = arith.constant 0 : index
    %c0_14 = arith.constant 0 : index
    %25 = vector.load %arg5[%c0_13, %c0_14] : memref<128x128xbf16, #tpu.memory_space<vmem>>, vector<128x128xbf16>
    %cst_15 = arith.constant dense<0.000000e+00> : vector<16x128xf32>
    %26 = tpu.matmul %24, %25, %cst_15 {dimension_numbers = #tpu.dot_dimension_numbers<[1], [0], [0], [1], [0, 0, 1, 1], [], []>} : vector<16x128xbf16>, vector<128x128xbf16>, vector<16x128xf32> -> vector<16x128xf32>
    %27 = arith.addf %23, %26 : vector<16x128xf32>
    %c0_16 = arith.constant 0 : index
    %c0_17 = arith.constant 0 : index
    %28 = vector.load %arg8[%c0_16, %c0_17] : memref<16x128xf32, #tpu.memory_space<vmem>>, vector<16x128xf32>
    tpu.vector_store %arg8[%c0_16, %c0_17], %27 {strides = array<i32>} : memref<16x128xf32, #tpu.memory_space<vmem>>, vector<16x128xf32>,
    %c0_i32_18 = arith.constant 0 : i32
    %29 = arith.cmpi eq, %arg1, %c0_i32_18 : i32
    %30 = arith.extui %29 : i1 to i32
    %c0_i32_19 = arith.constant 0 : i32
    %31 = arith.cmpi ne, %30, %c0_i32_19 : i32
    scf.if %31 {
      %c0_20 = arith.constant 0 : index
      %c0_21 = arith.constant 0 : index
      %32 = vector.load %arg8[%c0_20, %c0_21] : memref<16x128xf32, #tpu.memory_space<vmem>>, vector<16x128xf32>
      %c0_22 = arith.constant 0 : index
      %c0_23 = arith.constant 0 : index
      %33 = vector.load %arg6[%c0_22, %c0_23] : memref<1x128xf32, #tpu.memory_space<vmem>>, vector<1x128xf32>
      %34 = vector.broadcast %33 : vector<1x128xf32> to vector<16x128xf32>
      %35 = arith.addf %32, %34 : vector<16x128xf32>
      %c0_24 = arith.constant 0 : index
      %c0_25 = arith.constant 0 : index
      %36 = vector.load %arg7[%c0_24, %c0_25] : memref<16x128xf32, #tpu.memory_space<vmem>>, vector<16x128xf32>
      tpu.vector_store %arg7[%c0_24, %c0_25], %35 {strides = array<i32>} : memref<16x128xf32, #tpu.memory_space<vmem>>, vector<16x128xf32>,
    } else {
    }
    return
  }
  func.func @transform_0(%arg0: i32, %arg1: i32) -> (i32, i32) {
    %c0_i32 = arith.constant 0 : i32
    %c0_i32_0 = arith.constant 0 : i32
    return %arg0, %c0_i32 : i32, i32
  }
  func.func @transform_1(%arg0: i32, %arg1: i32) -> (i32, i32) {
    %c0_i32 = arith.constant 0 : i32
    %c0_i32_0 = arith.constant 0 : i32
    return %c0_i32, %arg1 : i32, i32
  }
  func.func @transform_2(%arg0: i32, %arg1: i32) -> (i32, i32) {
    %c0_i32 = arith.constant 0 : i32
    %c0_i32_0 = arith.constant 0 : i32
    return %c0_i32, %arg1 : i32, i32
  }
  func.func @transform_3(%arg0: i32, %arg1: i32) -> (i32, i32) {
    %c0_i32 = arith.constant 0 : i32
    %c0_i32_0 = arith.constant 0 : i32
    return %arg1, %c0_i32 : i32, i32
  }
  func.func @transform_4(%arg0: i32, %arg1: i32) -> (i32, i32) {
    %c0_i32 = arith.constant 0 : i32
    %c0_i32_0 = arith.constant 0 : i32
    %c0_i32_1 = arith.constant 0 : i32
    return %c0_i32, %c0_i32_0 : i32, i32
  }
  func.func @transform_5(%arg0: i32, %arg1: i32) -> (i32, i32) {
    %c0_i32 = arith.constant 0 : i32
    %c0_i32_0 = arith.constant 0 : i32
    return %arg0, %c0_i32 : i32, i32
  }
}

</mosaic_0001>

<llo_original>
// kernel: feed_forward.1
$region0: #{feed_forward.1}
  #allocation0 [shape = 'u32[]', space=smem, size = 0x4, offset = 0x4, fixed_abs, tag = 'smem constant byte address 0x4 - core index']
  #allocation1 [shape = 'u32[72,128]{1,0:T(1,128)}', space=vmem, size = 0x9000, scoped, tag = 'internal scratch']
  #allocation2 [shape = 'f32[16,128]{1,0:T(8,128)}', space=vmem, size = 0x2000, scoped, tag = 'scratch operand']
  %s0 = inlined_call_operand.vmem [shape: bf16[16,128], index: 0, kind: input, shape index: {}]
  %s1 = inlined_call_operand.vmem [shape: bf16[128,128], index: 1, kind: input, shape index: {}]
  %s2 = inlined_call_operand.vmem [shape: f32[1,128], index: 2, kind: input, shape index: {}]
  %s3 = inlined_call_operand.vmem [shape: bf16[128,128], index: 3, kind: input, shape index: {}]
  %s4 = inlined_call_operand.vmem [shape: f32[1,128], index: 4, kind: input, shape index: {}]
  %s5 = inlined_call_operand.vmem [shape: f32[16,128], index: 5, kind: output, shape index: {}]
  %s6 = sld [smem:[#allocation0]]
  $region38: #{feed_forward.1} parent=0
    _
  %s8 = ssub.s32 1, %s6
  %s9 = scalar_select 0, %s8, %s6
  // Predicated region
  $region2: #{feed_forward.1} parent=0 // pred_check
    _
  $region3: #{feed_forward.1} parent=0 // pred_check_branch
    %11 = sbr.rel (0) target = $region5
  $region4: #{feed_forward.1} parent=0 // pred_region
    _
  $region5: #{feed_forward.1} parent=0 // pred_fallthru
    _
  // Predicated region
  $region6: #{feed_forward.1} parent=0 // pred_check
    _
  $region7: #{feed_forward.1} parent=0 // pred_check_branch
    %13 = sbr.rel (0) target = $region9
  $region8: #{feed_forward.1} parent=0 // pred_region
    _
  $region9: #{feed_forward.1} parent=0 // pred_fallthru
    _
  // Predicated region
  $region10: #{feed_forward.1} parent=0 // pred_check
    _
  $region11: #{feed_forward.1} parent=0 // pred_check_branch
    %15 = sbr.rel (0) target = $region13
  $region12: #{feed_forward.1} parent=0 // pred_region
    _
  $region13: #{feed_forward.1} parent=0 // pred_fallthru
    _
  // Predicated region
  $region14: #{feed_forward.1} parent=0 // pred_check
    _
  $region15: #{feed_forward.1} parent=0 // pred_check_branch
    %17 = sbr.rel (0) target = $region17
  $region16: #{feed_forward.1} parent=0 // pred_region
    _
  $region17: #{feed_forward.1} parent=0 // pred_fallthru
    _
  // Predicated region
  $region18: #{feed_forward.1} parent=0 // pred_check
    _
  $region19: #{feed_forward.1} parent=0 // pred_check_branch
    %19 = sbr.rel (0) target = $region21
  $region20: #{feed_forward.1} parent=0 // pred_region
    _
  $region21: #{feed_forward.1} parent=0 // pred_fallthru
    _
  %p20 = scmp.eq.s32.totalorder 0, 0
  // Predicated region
  $region22: #{feed_forward.1} parent=0 // pred_check
    %p21 = pneg %p20
  $region23: #{feed_forward.1} parent=0 // pred_check_branch
    %23 = sbr.rel (%p21) target = $region25
  $region24: #{feed_forward.1} parent=0 // pred_region
    %24 = vst [vmem:[#allocation2] sm:$0xff] 0.0
    %25 = vst [vmem:[#allocation2 + $0x8] sm:$0xff] 0.0
  $region25: #{feed_forward.1} parent=0 // pred_fallthru
    _
  %v26 = vld [vmem:[%s0] sm:$0xf]
  %v27 = vld [vmem:[%s0 + $0x4] sm:$0xf]
  %v28 = vld [vmem:[%s1] sm:$0xf]
  %v29 = vld [vmem:[%s1 + $0x4] sm:$0xf]
  %v30 = vld [vmem:[%s1 + $0x8] sm:$0xf]
  %v31 = vld [vmem:[%s1 + $0xc] sm:$0xf]
  %v32 = vld [vmem:[%s1 + $0x10] sm:$0xf]
  %v33 = vld [vmem:[%s1 + $0x14] sm:$0xf]
  %v34 = vld [vmem:[%s1 + $0x18] sm:$0xf]
  %v35 = vld [vmem:[%s1 + $0x1c] sm:$0xf]
  %v36 = vld [vmem:[%s1 + $0x20] sm:$0xf]
  %v37 = vld [vmem:[%s1 + $0x24] sm:$0xf]
  %v38 = vld [vmem:[%s1 + $0x28] sm:$0xf]
  %v39 = vld [vmem:[%s1 + $0x2c] sm:$0xf]
  %v40 = vld [vmem:[%s1 + $0x30] sm:$0xf]
  %v41 = vld [vmem:[%s1 + $0x34] sm:$0xf]
  %v42 = vld [vmem:[%s1 + $0x38] sm:$0xf]
  %v43 = vld [vmem:[%s1 + $0x3c] sm:$0xf]
  %v44 = vld [vmem:[%s2] sm:$0x1]
  %v46 = vperm.slane %v44, 0
  %v50 = vunpack.c.l.b16 %v26
  %v51 = vunpack.c.l.b16 %v27
  %v52 = vpack.c.b16 %v51, %v50
  %v70 = vunpack.c.l.b16 %v28
  %v71 = vunpack.c.l.b16 %v29
  %v72 = vunpack.c.l.b16 %v30
  %v73 = vunpack.c.l.b16 %v31
  %v74 = vunpack.c.l.b16 %v32
  %v75 = vunpack.c.l.b16 %v33
  %v76 = vunpack.c.l.b16 %v34
  %v77 = vunpack.c.l.b16 %v35
  %v78 = vunpack.c.l.b16 %v36
  %v79 = vunpack.c.l.b16 %v37
  %v80 = vunpack.c.l.b16 %v38
  %v81 = vunpack.c.l.b16 %v39
  %v82 = vunpack.c.l.b16 %v40
  %v83 = vunpack.c.l.b16 %v41
  %v84 = vunpack.c.l.b16 %v42
  %v85 = vunpack.c.l.b16 %v43
  %v86 = vpack.c.b16 %v71, %v70
  %v87 = vpack.c.b16 %v73, %v72
  %v88 = vpack.c.b16 %v75, %v74
  %v89 = vpack.c.b16 %v77, %v76
  %v90 = vpack.c.b16 %v79, %v78
  %v91 = vpack.c.b16 %v81, %v80
  %v92 = vpack.c.b16 %v83, %v82
  %v93 = vpack.c.b16 %v85, %v84
  %102 = vmatpush.bf16.msra.mxu0 %v93
  %103 = vmatpush.bf16.msra.mxu0 %v92
  %104 = vmatpush.bf16.msra.mxu0 %v91
  %105 = vmatpush.bf16.msra.mxu0 %v90
  %106 = vmatpush.bf16.msra.mxu0 %v89
  %107 = vmatpush.bf16.msra.mxu0 %v88
  %108 = vmatpush.bf16.msra.mxu0 %v87
  %109 = vmatpush.bf16.msra.mxu0 %v86
  %110 = vmatmul.bf16.gmra.mxu0 %v52
  %v111 = vpop.f32.mrf.mxu0
  %v112 = vadd.f32 %v46, %v111
  %v113 = vpop.f32.mrf.mxu0
  %v114 = vadd.f32 %v46, %v113
  %115 = vdwg.mxu0
  %v116 = vmul.f32 %v112, 0.7978846
  %v117 = vmul.f32 %v114, 0.7978846
  %v118 = vmul.f32 %v112, %v112
  %v119 = vmul.f32 %v114, %v114
  %v120 = vmul.f32 %v118, 0.044715
  %v121 = vmul.f32 %v119, 0.044715
  %v122 = vadd.f32 %v120, 1.0
  %v123 = vadd.f32 %v121, 1.0
  %v124 = vmul.f32 %v116, %v122
  %v125 = vmul.f32 %v117, %v123
  %v126 = vmul.f32 %v112, 0.5
  %v127 = vmul.f32 %v114, 0.5
  %v128 = vtanh.pop %v124
  %v129 = vtanh.pop %v125
  %v130 = vadd.f32 %v128, 1.0
  %v131 = vadd.f32 %v129, 1.0
  %v132 = vmul.f32 %v126, %v130
  %v133 = vmul.f32 %v127, %v131
  %v134 = vld [vmem:[#allocation2] sm:$0xff]
  %v135 = vld [vmem:[#allocation2 + $0x8] sm:$0xff]
  %v136 = vpack.c.bf16 %v133, %v132
  %v137 = vld [vmem:[%s3] sm:$0xf]
  %v138 = vld [vmem:[%s3 + $0x4] sm:$0xf]
  %v139 = vld [vmem:[%s3 + $0x8] sm:$0xf]
  %v140 = vld [vmem:[%s3 + $0xc] sm:$0xf]
  %v141 = vld [vmem:[%s3 + $0x10] sm:$0xf]
  %v142 = vld [vmem:[%s3 + $0x14] sm:$0xf]
  %v143 = vld [vmem:[%s3 + $0x18] sm:$0xf]
  %v144 = vld [vmem:[%s3 + $0x1c] sm:$0xf]
  %v145 = vld [vmem:[%s3 + $0x20] sm:$0xf]
  %v146 = vld [vmem:[%s3 + $0x24] sm:$0xf]
  %v147 = vld [vmem:[%s3 + $0x28] sm:$0xf]
  %v148 = vld [vmem:[%s3 + $0x2c] sm:$0xf]
  %v149 = vld [vmem:[%s3 + $0x30] sm:$0xf]
  %v150 = vld [vmem:[%s3 + $0x34] sm:$0xf]
  %v151 = vld [vmem:[%s3 + $0x38] sm:$0xf]
  %v152 = vld [vmem:[%s3 + $0x3c] sm:$0xf]
  %v169 = vunpack.c.l.b16 %v137
  %v170 = vunpack.c.l.b16 %v138
  %v171 = vunpack.c.l.b16 %v139
  %v172 = vunpack.c.l.b16 %v140
  %v173 = vunpack.c.l.b16 %v141
  %v174 = vunpack.c.l.b16 %v142
  %v175 = vunpack.c.l.b16 %v143
  %v176 = vunpack.c.l.b16 %v144
  %v177 = vunpack.c.l.b16 %v145
  %v178 = vunpack.c.l.b16 %v146
  %v179 = vunpack.c.l.b16 %v147
  %v180 = vunpack.c.l.b16 %v148
  %v181 = vunpack.c.l.b16 %v149
  %v182 = vunpack.c.l.b16 %v150
  %v183 = vunpack.c.l.b16 %v151
  %v184 = vunpack.c.l.b16 %v152
  %v185 = vpack.c.b16 %v170, %v169
  %v186 = vpack.c.b16 %v172, %v171
  %v187 = vpack.c.b16 %v174, %v173
  %v188 = vpack.c.b16 %v176, %v175
  %v189 = vpack.c.b16 %v178, %v177
  %v190 = vpack.c.b16 %v180, %v179
  %v191 = vpack.c.b16 %v182, %v181
  %v192 = vpack.c.b16 %v184, %v183
  %201 = vmatpush.bf16.msra.mxu0 %v192
  %202 = vmatpush.bf16.msra.mxu0 %v191
  %203 = vmatpush.bf16.msra.mxu0 %v190
  %204 = vmatpush.bf16.msra.mxu0 %v189
  %205 = vmatpush.bf16.msra.mxu0 %v188
  %206 = vmatpush.bf16.msra.mxu0 %v187
  %207 = vmatpush.bf16.msra.mxu0 %v186
  %208 = vmatpush.bf16.msra.mxu0 %v185
  %209 = vmatmul.bf16.gmra.mxu0 %v136
  %v210 = vpop.f32.mrf.mxu0
  %v211 = vadd.f32 0.0, %v210
  %v212 = vpop.f32.mrf.mxu0
  %v213 = vadd.f32 0.0, %v212
  %214 = vdwg.mxu0
  %v215 = vadd.f32 %v134, %v211
  %v216 = vadd.f32 %v135, %v213
  %217 = vst [vmem:[#allocation2] sm:$0xff] %v215
  %218 = vst [vmem:[#allocation2 + $0x8] sm:$0xff] %v216
  // Predicated region
  $region26: #{feed_forward.1} parent=0 // pred_check
    %p219 = pneg %p20
  $region27: #{feed_forward.1} parent=0 // pred_check_branch
    %221 = sbr.rel (%p219) target = $region29
  $region28: #{feed_forward.1} parent=0 // pred_region
    %v222 = vld [vmem:[#allocation2] sm:$0xff]
    %v223 = vld [vmem:[#allocation2 + $0x8] sm:$0xff]
    %v224 = vld [vmem:[%s4] sm:$0x1]
    %v226 = vperm.slane %v224, 0
    %v228 = vadd.f32 %v222, %v226
    %v229 = vadd.f32 %v223, %v226
    %230 = vst [vmem:[%s5] sm:$0xff] %v228
    %231 = vst [vmem:[%s5 + $0x8] sm:$0xff] %v229
  $region29: #{feed_forward.1} parent=0 // pred_fallthru
    _
  // Predicated region
  $region30: #{feed_forward.1} parent=0 // pred_check
    _
  $region31: #{feed_forward.1} parent=0 // pred_check_branch
    %233 = sbr.rel (0) target = $region33
  $region32: #{feed_forward.1} parent=0 // pred_region
    _
  $region33: #{feed_forward.1} parent=0 // pred_fallthru
    _
  // Predicated region
  $region34: #{feed_forward.1} parent=0 // pred_check
    _
  $region35: #{feed_forward.1} parent=0 // pred_check_branch
    %235 = sbr.rel (0) target = $region37
  $region36: #{feed_forward.1} parent=0 // pred_region
    _
  $region37: #{feed_forward.1} parent=0 // pred_fallthru
    _

</llo_original>
